<compile_context>
chip_gen: v5e
topology: v5e:2x2
jax: 0.10.0
libtpu: 0.0.40
codegen_flags: <defaults>
</compile_context>

<pallas_src>
import functools

import jax
import jax.numpy as jnp
from jax.experimental import pallas as pl
from jax.experimental.pallas import tpu as pltpu

_TILE_B = 8  # batch rows per output tile (sublane-dense (8, 128) stores)


def _make_kernel(tile_b: int, p: float, use_dropout: bool):
    inv_keep = 1.0 / (1.0 - p) if p < 1.0 else 0.0

    def kernel(uid_ref, iid_ref,      # scalar prefetch (SMEM); used by index_maps
               urow_ref, irow_ref,    # gathered rows, each (1, 1, D) in VMEM
               *rest):
        if use_dropout:
            randu_ref, randi_ref, uout_ref, iout_ref, u_scr, i_scr = rest
        else:
            uout_ref, iout_ref, u_scr, i_scr = rest
        del uid_ref, iid_ref  # only consumed by the index_maps

        r = pl.program_id(1)  # row within the current batch tile

        # Stage the gathered embedding rows into the (tile_b, D) scratch.
        u_scr[pl.ds(r, 1), :] = urow_ref[0]
        i_scr[pl.ds(r, 1), :] = irow_ref[0]

        # Once the tile is fully gathered, fuse dropout and emit one dense
        # (tile_b, D) store per output (no reload/restore of the outputs).
        @pl.when(r == tile_b - 1)
        def _():
            u = u_scr[...]
            it = i_scr[...]
            if use_dropout:
                scale = jnp.float32(inv_keep)
                u = jnp.where(randu_ref[...] >= jnp.float32(p), u * scale, 0.0)
                it = jnp.where(randi_ref[...] >= jnp.float32(p), it * scale, 0.0)
            uout_ref[...] = u.astype(uout_ref.dtype)
            iout_ref[...] = it.astype(iout_ref.dtype)

    return kernel


@functools.partial(jax.jit, static_argnames=("p", "training"))
def lightgcn_forward(user_ids, item_ids, user_table, item_table, dropout_key,
                     *, p: float = 0.2, training: bool = True):
    """Returns (user_embeddings, item_embeddings), each [batch, D]."""
    batch = user_ids.shape[0]
    num_users, dim = user_table.shape
    num_items, dim_i = item_table.shape
    assert dim_i == dim and item_ids.shape[0] == batch

    use_dropout = bool(training) and p > 0.0
    tb = _TILE_B
    batch_pad = ((batch + tb - 1) // tb) * tb
    num_tiles = batch_pad // tb

    uid = jnp.pad(user_ids.astype(jnp.int32), (0, batch_pad - batch))
    iid = jnp.pad(item_ids.astype(jnp.int32), (0, batch_pad - batch))

    # (N, D) -> (N, 1, D) view: the gathered block's trailing dims are then
    # exactly (1, D) == the full array dims (always layout-legal on TPU), and
    # the leading (row) axis is indexed per-step from the SMEM ids.
    utab = user_table.reshape(num_users, 1, dim)
    itab = item_table.reshape(num_items, 1, dim)

    row_u_spec = pl.BlockSpec(
        (1, 1, dim), lambda t, r, u_ids, i_ids: (u_ids[t * tb + r], 0, 0))
    row_i_spec = pl.BlockSpec(
        (1, 1, dim), lambda t, r, u_ids, i_ids: (i_ids[t * tb + r], 0, 0))
    tile_spec = pl.BlockSpec((tb, dim), lambda t, r, u_ids, i_ids: (t, 0))

    in_specs = [row_u_spec, row_i_spec]
    inputs = [utab, itab]
    if use_dropout:
        # One PRNG draw covers both outputs.
        rand = jax.random.uniform(dropout_key, (2, batch_pad, dim),
                                  dtype=jnp.float32)
        in_specs += [tile_spec, tile_spec]
        inputs += [rand[0], rand[1]]

    grid_spec = pltpu.PrefetchScalarGridSpec(
        num_scalar_prefetch=2,  # user_ids, item_ids live in SMEM
        grid=(num_tiles, tb),
        in_specs=in_specs,
        out_specs=(tile_spec, tile_spec),
        scratch_shapes=[pltpu.VMEM((tb, dim), user_table.dtype),
                        pltpu.VMEM((tb, dim), item_table.dtype)],
    )

    out_shape = (jax.ShapeDtypeStruct((batch_pad, dim), user_table.dtype),
                 jax.ShapeDtypeStruct((batch_pad, dim), item_table.dtype))

    u_out, i_out = pl.pallas_call(
        _make_kernel(tb, float(p), use_dropout),
        grid_spec=grid_spec,
        out_shape=out_shape,
        compiler_params=pltpu.CompilerParams(
            dimension_semantics=("parallel", "arbitrary")),
    )(uid, iid, *inputs)

    return u_out[:batch], i_out[:batch]


def xavier_uniform(key, shape, dtype=jnp.float32):
    fan_in, fan_out = shape
    bound = (6.0 / (fan_in + fan_out)) ** 0.5
    return jax.random.uniform(key, shape, dtype=dtype,
                              minval=-bound, maxval=bound)


if __name__ == "__main__":
    # Small, deterministic problem sizes.
    num_users, num_items, embedding_dim, batch = 64, 96, 128, 8
    p_drop = 0.2

    root = jax.random.PRNGKey(0)
    k_u, k_i, k_uid, k_iid, k_drop = jax.random.split(root, 5)

    user_table = xavier_uniform(k_u, (num_users, embedding_dim))
    item_table = xavier_uniform(k_i, (num_items, embedding_dim))

    user_ids = jax.random.randint(k_uid, (batch,), 0, num_users, dtype=jnp.int32)
    item_ids = jax.random.randint(k_iid, (batch,), 0, num_items, dtype=jnp.int32)

    # Training-mode forward (gather + inverted dropout).
    u_emb, i_emb = lightgcn_forward(user_ids, item_ids, user_table, item_table,
                                    k_drop, p=p_drop, training=True)
    u_emb = jax.block_until_ready(u_emb)
    i_emb = jax.block_until_ready(i_emb)
    assert u_emb.shape == (batch, embedding_dim)
    assert i_emb.shape == (batch, embedding_dim)

    # Exact reference: regenerate the same dropout uniforms the wrapper used.
    batch_pad = ((batch + _TILE_B - 1) // _TILE_B) * _TILE_B
    rand = jax.random.uniform(k_drop, (2, batch_pad, embedding_dim),
                              dtype=jnp.float32)
    scale = 1.0 / (1.0 - p_drop)
    u_ref = jnp.where(rand[0, :batch] >= p_drop, user_table[user_ids] * scale, 0.0)
    i_ref = jnp.where(rand[1, :batch] >= p_drop, item_table[item_ids] * scale, 0.0)
    assert jnp.allclose(u_emb, u_ref, atol=1e-6), "user dropout/gather mismatch"
    assert jnp.allclose(i_emb, i_ref, atol=1e-6), "item dropout/gather mismatch"

    # Eval-mode forward (pure gather, no dropout / no scaling).
    u_ev, i_ev = lightgcn_forward(user_ids, item_ids, user_table, item_table,
                                  k_drop, p=p_drop, training=False)
    u_ev = jax.block_until_ready(u_ev)
    i_ev = jax.block_until_ready(i_ev)
    assert jnp.allclose(u_ev, user_table[user_ids], atol=1e-6)
    assert jnp.allclose(i_ev, item_table[item_ids], atol=1e-6)

    print("KERNEL_OK")
</pallas_src>

<mosaic_0001>
module attributes {stable_mosaic.version = 11 : i64} {
  func.func @kernel(%arg0: i32, %arg1: i32, %arg2: memref<8xi32, #tpu.memory_space<smem>>, %arg3: memref<8xi32, #tpu.memory_space<smem>>, %arg4: memref<1x1x128xf32, #tpu.memory_space<vmem>>, %arg5: memref<1x1x128xf32, #tpu.memory_space<vmem>>, %arg6: memref<8x128xf32, #tpu.memory_space<vmem>>, %arg7: memref<8x128xf32, #tpu.memory_space<vmem>>, %arg8: memref<8x128xf32, #tpu.memory_space<vmem>>, %arg9: memref<8x128xf32, #tpu.memory_space<vmem>>, %arg10: memref<8x128xf32, #tpu.memory_space<vmem>>, %arg11: memref<8x128xf32, #tpu.memory_space<vmem>>) attributes {dimension_semantics = [#tpu.dimension_semantics<parallel>, #tpu.dimension_semantics<arbitrary>], iteration_bounds = array<i64: 1, 8>, scalar_prefetch = 2 : i64, scratch_operands = 2 : i64, tpu.core_type = #tpu.core_type<tc>, window_params = [{transform_indices = @transform_0, window_bounds = array<i64: 1, 1, 128>}, {transform_indices = @transform_1, window_bounds = array<i64: 1, 1, 128>}, {transform_indices = @transform_2, window_bounds = array<i64: 8, 128>}, {transform_indices = @transform_3, window_bounds = array<i64: 8, 128>}, {transform_indices = @transform_4, window_bounds = array<i64: 8, 128>}, {transform_indices = @transform_5, window_bounds = array<i64: 8, 128>}]} {
    %c0 = arith.constant 0 : index
    %c0_0 = arith.constant 0 : index
    %c0_1 = arith.constant 0 : index
    %0 = vector.load %arg4[%c0, %c0_0, %c0_1] : memref<1x1x128xf32, #tpu.memory_space<vmem>>, vector<1x1x128xf32>
    %1 = vector.shape_cast %0 : vector<1x1x128xf32> to vector<1x128xf32>
    %2 = arith.index_cast %arg1 : i32 to index
    %c0_2 = arith.constant 0 : index
    %3 = vector.load %arg10[%2, %c0_2] : memref<8x128xf32, #tpu.memory_space<vmem>>, vector<1x128xf32>
    tpu.vector_store %arg10[%2, %c0_2], %1 {strides = array<i32>} : memref<8x128xf32, #tpu.memory_space<vmem>>, vector<1x128xf32>,
    %c0_3 = arith.constant 0 : index
    %c0_4 = arith.constant 0 : index
    %c0_5 = arith.constant 0 : index
    %4 = vector.load %arg5[%c0_3, %c0_4, %c0_5] : memref<1x1x128xf32, #tpu.memory_space<vmem>>, vector<1x1x128xf32>
    %5 = vector.shape_cast %4 : vector<1x1x128xf32> to vector<1x128xf32>
    %6 = arith.index_cast %arg1 : i32 to index
    %c0_6 = arith.constant 0 : index
    %7 = vector.load %arg11[%6, %c0_6] : memref<8x128xf32, #tpu.memory_space<vmem>>, vector<1x128xf32>
    tpu.vector_store %arg11[%6, %c0_6], %5 {strides = array<i32>} : memref<8x128xf32, #tpu.memory_space<vmem>>, vector<1x128xf32>,
    %c7_i32 = arith.constant 7 : i32
    %8 = arith.cmpi eq, %arg1, %c7_i32 : i32
    %9 = arith.extui %8 : i1 to i32
    %c0_i32 = arith.constant 0 : i32
    %10 = arith.cmpi ne, %9, %c0_i32 : i32
    scf.if %10 {
      %c0_7 = arith.constant 0 : index
      %c0_8 = arith.constant 0 : index
      %11 = vector.load %arg10[%c0_7, %c0_8] : memref<8x128xf32, #tpu.memory_space<vmem>>, vector<8x128xf32>
      %c0_9 = arith.constant 0 : index
      %c0_10 = arith.constant 0 : index
      %12 = vector.load %arg11[%c0_9, %c0_10] : memref<8x128xf32, #tpu.memory_space<vmem>>, vector<8x128xf32>
      %c0_11 = arith.constant 0 : index
      %c0_12 = arith.constant 0 : index
      %13 = vector.load %arg6[%c0_11, %c0_12] : memref<8x128xf32, #tpu.memory_space<vmem>>, vector<8x128xf32>
      %cst = arith.constant 2.000000e-01 : f32
      %14 = vector.broadcast %cst : f32 to vector<8x128xf32>
      %15 = arith.cmpf oge, %13, %14 : vector<8x128xf32>
      %cst_13 = arith.constant 1.250000e+00 : f32
      %16 = vector.broadcast %cst_13 : f32 to vector<8x128xf32>
      %17 = arith.mulf %11, %16 : vector<8x128xf32>
      %cst_14 = arith.constant 0.000000e+00 : f32
      %18 = vector.broadcast %cst_14 : f32 to vector<8x128xf32>
      %19 = arith.select %15, %17, %18 : vector<8x128xi1>, vector<8x128xf32>
      %c0_15 = arith.constant 0 : index
      %c0_16 = arith.constant 0 : index
      %20 = vector.load %arg7[%c0_15, %c0_16] : memref<8x128xf32, #tpu.memory_space<vmem>>, vector<8x128xf32>
      %cst_17 = arith.constant 2.000000e-01 : f32
      %21 = vector.broadcast %cst_17 : f32 to vector<8x128xf32>
      %22 = arith.cmpf oge, %20, %21 : vector<8x128xf32>
      %cst_18 = arith.constant 1.250000e+00 : f32
      %23 = vector.broadcast %cst_18 : f32 to vector<8x128xf32>
      %24 = arith.mulf %12, %23 : vector<8x128xf32>
      %cst_19 = arith.constant 0.000000e+00 : f32
      %25 = vector.broadcast %cst_19 : f32 to vector<8x128xf32>
      %26 = arith.select %22, %24, %25 : vector<8x128xi1>, vector<8x128xf32>
      %c0_20 = arith.constant 0 : index
      %c0_21 = arith.constant 0 : index
      %27 = vector.load %arg8[%c0_20, %c0_21] : memref<8x128xf32, #tpu.memory_space<vmem>>, vector<8x128xf32>
      tpu.vector_store %arg8[%c0_20, %c0_21], %19 {strides = array<i32>} : memref<8x128xf32, #tpu.memory_space<vmem>>, vector<8x128xf32>,
      %c0_22 = arith.constant 0 : index
      %c0_23 = arith.constant 0 : index
      %28 = vector.load %arg9[%c0_22, %c0_23] : memref<8x128xf32, #tpu.memory_space<vmem>>, vector<8x128xf32>
      tpu.vector_store %arg9[%c0_22, %c0_23], %26 {strides = array<i32>} : memref<8x128xf32, #tpu.memory_space<vmem>>, vector<8x128xf32>,
    } else {
    }
    return
  }
  func.func @transform_0(%arg0: i32, %arg1: i32, %arg2: memref<8xi32, #tpu.memory_space<smem>>, %arg3: memref<8xi32, #tpu.memory_space<smem>>) -> (i32, i32, i32) {
    %c8_i32 = arith.constant 8 : i32
    %0 = arith.muli %arg0, %c8_i32 : i32
    %1 = arith.addi %0, %arg1 : i32
    %2 = arith.index_cast %1 : i32 to index
    %3 = memref.load %arg2[%2] : memref<8xi32, #tpu.memory_space<smem>>
    %c0_i32 = arith.constant 0 : i32
    %c0_i32_0 = arith.constant 0 : i32
    %c0_i32_1 = arith.constant 0 : i32
    return %3, %c0_i32, %c0_i32_0 : i32, i32, i32
  }
  func.func @transform_1(%arg0: i32, %arg1: i32, %arg2: memref<8xi32, #tpu.memory_space<smem>>, %arg3: memref<8xi32, #tpu.memory_space<smem>>) -> (i32, i32, i32) {
    %c8_i32 = arith.constant 8 : i32
    %0 = arith.muli %arg0, %c8_i32 : i32
    %1 = arith.addi %0, %arg1 : i32
    %2 = arith.index_cast %1 : i32 to index
    %3 = memref.load %arg3[%2] : memref<8xi32, #tpu.memory_space<smem>>
    %c0_i32 = arith.constant 0 : i32
    %c0_i32_0 = arith.constant 0 : i32
    %c0_i32_1 = arith.constant 0 : i32
    return %3, %c0_i32, %c0_i32_0 : i32, i32, i32
  }
  func.func @transform_2(%arg0: i32, %arg1: i32, %arg2: memref<8xi32, #tpu.memory_space<smem>>, %arg3: memref<8xi32, #tpu.memory_space<smem>>) -> (i32, i32) {
    %c0_i32 = arith.constant 0 : i32
    %c0_i32_0 = arith.constant 0 : i32
    return %arg0, %c0_i32 : i32, i32
  }
  func.func @transform_3(%arg0: i32, %arg1: i32, %arg2: memref<8xi32, #tpu.memory_space<smem>>, %arg3: memref<8xi32, #tpu.memory_space<smem>>) -> (i32, i32) {
    %c0_i32 = arith.constant 0 : i32
    %c0_i32_0 = arith.constant 0 : i32
    return %arg0, %c0_i32 : i32, i32
  }
  func.func @transform_4(%arg0: i32, %arg1: i32, %arg2: memref<8xi32, #tpu.memory_space<smem>>, %arg3: memref<8xi32, #tpu.memory_space<smem>>) -> (i32, i32) {
    %c0_i32 = arith.constant 0 : i32
    %c0_i32_0 = arith.constant 0 : i32
    return %arg0, %c0_i32 : i32, i32
  }
  func.func @transform_5(%arg0: i32, %arg1: i32, %arg2: memref<8xi32, #tpu.memory_space<smem>>, %arg3: memref<8xi32, #tpu.memory_space<smem>>) -> (i32, i32) {
    %c0_i32 = arith.constant 0 : i32
    %c0_i32_0 = arith.constant 0 : i32
    return %arg0, %c0_i32 : i32, i32
  }
}

</mosaic_0001>

<llo_original>
// kernel: lightgcn_forward.1
$region0: #{lightgcn_forward.1}
  #allocation0 [shape = 'u32[]', space=smem, size = 0x4, offset = 0x4, fixed_abs, tag = 'smem constant byte address 0x4 - core index']
  #allocation1 [shape = 'u32[72,128]{1,0:T(1,128)}', space=vmem, size = 0x9000, scoped, tag = 'internal scratch']
  #allocation2 [shape = 'f32[8,128]{1,0:T(8,128)}', space=vmem, size = 0x1000, scoped, tag = 'scratch operand']
  #allocation3 [shape = 'f32[8,128]{1,0:T(8,128)}', space=vmem, size = 0x1000, scoped, tag = 'scratch operand']
  #allocation4 [shape = 's32[1]{0}', space=sflag, size = 0x4, scoped, tag = 'scoped memory for lightgcn_forward.1']
  #allocation5 [shape = 'u8[512]{0}', space=smem, size = 0x200, scoped, tag = 'prefetched SMEM operand 0']
  #allocation6 [shape = 'u8[512]{0}', space=smem, size = 0x200, scoped, tag = 'prefetched SMEM operand 1']
  %s0 = inlined_call_operand.vmem [shape: s32[8], index: 0, kind: input, shape index: {}]
  %s1 = inlined_call_operand.vmem [shape: s32[8], index: 1, kind: input, shape index: {}]
  %s2 = inlined_call_operand.vmem [shape: f32[64,1,128], index: 2, kind: input, shape index: {}]
  %s3 = inlined_call_operand.hbm [shape: f32[96,1,128], index: 3, kind: input, shape index: {}]
  %s4 = inlined_call_operand.vmem [shape: f32[8,128], index: 4, kind: input, shape index: {}]
  %s5 = inlined_call_operand.vmem [shape: f32[8,128], index: 5, kind: input, shape index: {}]
  %s6 = inlined_call_operand.hbm [shape: f32[8,128], index: 6, kind: output, shape index: {0}]
  %s7 = inlined_call_operand.hbm [shape: f32[8,128], index: 7, kind: output, shape index: {1}]
  %8 = xla_tuple %s6, %s7
  %s9 = sld [smem:[#allocation0]]
  $region65: #{lightgcn_forward.1} parent=0
    _
  %s11 = ssub.s32 1, %s9
  %s12 = scalar_select 0, %s11, %s9
  %s14 = sshll.u32 %s0, 4
  %s15 = int_to_ptr.vmem [resolvable:$true] %s14
  %17 = dma.vmem_to_smem %s15, 16, [#allocation5], [#allocation4]
  %s19 = sshll.u32 %s1, 4
  %s20 = int_to_ptr.vmem [resolvable:$true] %s19
  %22 = dma.vmem_to_smem %s20, 16, [#allocation6], [#allocation4]
  %24 = dma.done [#allocation4], 32
  %25 = sfence
  $region1: #{lightgcn_forward.1} parent=0
    #allocation7 [shape = 'u8[1024]{0}', space=vmem, size = 0x400, scoped, tag = 'input window, operand 3']
    #allocation8 [shape = 's32[2]{0}', space=sflag, size = 0x8, scoped, tag = 'scoped memory for lightgcn_forward.1']
    #allocation9 [shape = 's32[2]{0}', space=sflag, size = 0x8, scoped, tag = 'scoped memory for lightgcn_forward.1']
    #allocation10 [shape = 'u8[4096]{0}', space=vmem, size = 0x1000, scoped, tag = 'output window, operand 0, single buffered']
    #allocation11 [shape = 'u8[4096]{0}', space=vmem, size = 0x1000, scoped, tag = 'output window, operand 1, single buffered']
    #allocation12 [shape = 's32[1]{0}', space=sflag, size = 0x4, scoped, tag = 'scoped memory for lightgcn_forward.1']
    %26 = vsyncpa [#allocation8], 0
    %s27 = scalar_lea.sflag [#allocation8], 1
    %28 = vsyncpa %s27, 0
    %29 = vsyncpa [#allocation9], 0
    %30 = vsyncpa [#allocation12], 0
    loop: start=0, step=1, limit=10
    $region2: #{lightgcn_forward.1} parent=1 // loop_pre_header
      _
    $region3: #{lightgcn_forward.1} parent=1 // loop_header
      %s32 = sphi 0, %s36
      %p33 = scmp.ge.s32.totalorder %s32, 10
      %s39 = sphi 0, %s51
      %s40 = sphi 0, %s47
      %s41 = sphi 0, %s39
      %s42 = sphi 0, %s40
      %s43 = sphi 0, %s41
      %s44 = sphi 0, %s42
      %s60 = sphi 0, %s62
      %s63 = sphi 0, %s60
      %s64 = sphi 0, %s63
      %s80 = sphi 0, %s64
      %s92 = sphi 0, %s94
      %s95 = sphi 0, %s92
      %s96 = sphi 0, %s95
      %s112 = sphi 0, %s96
      %s118 = sphi 0, %s120
      %s121 = sphi 0, %s118
      %s122 = sphi 0, %s121
      %s138 = sphi 0, %s122
      %s144 = sphi 0, %s146
      %s147 = sphi 0, %s144
      %s148 = sphi 0, %s147
      %s164 = sphi 0, %s148
      %s170 = sphi 0, %s172
      %s173 = sphi 0, %s170
      %s174 = sphi 0, %s173
      %s190 = sphi 0, %s174
      %s196 = sphi 0, %s198
      %s199 = sphi 0, %s196
      %s200 = sphi 0, %s199
      %s216 = sphi 0, %s200
    $region4: #{lightgcn_forward.1} parent=1 // loop_header_branch
      %35 = sbr.rel (%p33) target = $region8
    $region5: #{lightgcn_forward.1} parent=1 // loop_body
      %s37 = ssub.s32 %s32, 1
      %s38 = ssub.s32 %s32, 2
      %s45 = sadd.s32 1, %s40
      %p46 = scmp.ge.s32.totalorder %s45, 8
      %s47 = scalar_select %p46, 0, %s45
      %s48 = sadd.s32 1, %s39
      %s49 = scalar_select %p46, %s48, %s39
      %p50 = scmp.ge.s32.totalorder %s49, 1
      %s51 = scalar_select %p50, 0, %s49
      %s52 = smul.u32 %s39, 8
      %s53 = sadd.s32 %s52, %s40
      %s54 = sld [smem:[#allocation5 + %s53]]
      %s55 = smul.u32 %s51, 8
      %s56 = sadd.s32 %s55, %s47
      %s57 = sld [smem:[#allocation5 + %s56]]
      %s58 = ssub.s32 %s54, %s57
      %p59 = scmp.eq.s32.totalorder %s58, 0
      %s61 = sadd.s32 %s60, 1
      %s62 = scalar_select %p59, %s60, %s61
      %p65 = pneg %p59
      %p66 = scmp.eq.s32.totalorder %s32, 7
      %p67 = por %p65, %p66
      %p68 = scmp.ne.s32.totalorder %s60, %s63
      %p69 = scmp.eq.s32.totalorder %s32, 0
      %p70 = por %p68, %p69
      %p71 = scmp.ne.s32.totalorder %s60, %s63
      %p72 = scmp.eq.s32.totalorder %s37, 7
      %p73 = por %p71, %p72
      %p74 = scmp.ne.s32.totalorder %s63, %s64
      %p75 = scmp.eq.s32.totalorder %s37, 0
      %p76 = por %p74, %p75
      %p77 = scmp.ne.s32.totalorder %s63, %s64
      %p78 = scmp.eq.s32.totalorder %s38, 7
      %p79 = por %p77, %p78
      %p81 = scmp.ne.s32.totalorder %s64, %s80
      %p82 = scmp.eq.s32.totalorder %s38, 0
      %p83 = por %p81, %p82
      %s84 = smul.u32 %s39, 8
      %s85 = sadd.s32 %s84, %s40
      %s86 = sld [smem:[#allocation6 + %s85]]
      %s87 = smul.u32 %s51, 8
      %s88 = sadd.s32 %s87, %s47
      %s89 = sld [smem:[#allocation6 + %s88]]
      %s90 = ssub.s32 %s86, %s89
      %p91 = scmp.eq.s32.totalorder %s90, 0
      %s93 = sadd.s32 %s92, 1
      %s94 = scalar_select %p91, %s92, %s93
      %p97 = pneg %p91
      %p98 = scmp.eq.s32.totalorder %s32, 7
      %p99 = por %p97, %p98
      %p100 = scmp.ne.s32.totalorder %s92, %s95
      %p101 = scmp.eq.s32.totalorder %s32, 0
      %p102 = por %p100, %p101
      %p103 = scmp.ne.s32.totalorder %s92, %s95
      %p104 = scmp.eq.s32.totalorder %s37, 7
      %p105 = por %p103, %p104
      %p106 = scmp.ne.s32.totalorder %s95, %s96
      %p107 = scmp.eq.s32.totalorder %s37, 0
      %p108 = por %p106, %p107
      %p109 = scmp.ne.s32.totalorder %s95, %s96
      %p110 = scmp.eq.s32.totalorder %s38, 7
      %p111 = por %p109, %p110
      %p113 = scmp.ne.s32.totalorder %s96, %s112
      %p114 = scmp.eq.s32.totalorder %s38, 0
      %p115 = por %p113, %p114
      %s116 = ssub.s32 %s39, %s51
      %p117 = scmp.eq.s32.totalorder %s116, 0
      %s119 = sadd.s32 %s118, 1
      %s120 = scalar_select %p117, %s118, %s119
      %p123 = pneg %p117
      %p124 = scmp.eq.s32.totalorder %s32, 7
      %p125 = por %p123, %p124
      %p126 = scmp.ne.s32.totalorder %s118, %s121
      %p127 = scmp.eq.s32.totalorder %s32, 0
      %p128 = por %p126, %p127
      %p129 = scmp.ne.s32.totalorder %s118, %s121
      %p130 = scmp.eq.s32.totalorder %s37, 7
      %p131 = por %p129, %p130
      %p132 = scmp.ne.s32.totalorder %s121, %s122
      %p133 = scmp.eq.s32.totalorder %s37, 0
      %p134 = por %p132, %p133
      %p135 = scmp.ne.s32.totalorder %s121, %s122
      %p136 = scmp.eq.s32.totalorder %s38, 7
      %p137 = por %p135, %p136
      %p139 = scmp.ne.s32.totalorder %s122, %s138
      %p140 = scmp.eq.s32.totalorder %s38, 0
      %p141 = por %p139, %p140
      %s142 = ssub.s32 %s39, %s51
      %p143 = scmp.eq.s32.totalorder %s142, 0
      %s145 = sadd.s32 %s144, 1
      %s146 = scalar_select %p143, %s144, %s145
      %p149 = pneg %p143
      %p150 = scmp.eq.s32.totalorder %s32, 7
      %p151 = por %p149, %p150
      %p152 = scmp.ne.s32.totalorder %s144, %s147
      %p153 = scmp.eq.s32.totalorder %s32, 0
      %p154 = por %p152, %p153
      %p155 = scmp.ne.s32.totalorder %s144, %s147
      %p156 = scmp.eq.s32.totalorder %s37, 7
      %p157 = por %p155, %p156
      %p158 = scmp.ne.s32.totalorder %s147, %s148
      %p159 = scmp.eq.s32.totalorder %s37, 0
      %p160 = por %p158, %p159
      %p161 = scmp.ne.s32.totalorder %s147, %s148
      %p162 = scmp.eq.s32.totalorder %s38, 7
      %p163 = por %p161, %p162
      %p165 = scmp.ne.s32.totalorder %s148, %s164
      %p166 = scmp.eq.s32.totalorder %s38, 0
      %p167 = por %p165, %p166
      %s168 = ssub.s32 %s39, %s51
      %p169 = scmp.eq.s32.totalorder %s168, 0
      %s171 = sadd.s32 %s170, 1
      %s172 = scalar_select %p169, %s170, %s171
      %p175 = pneg %p169
      %p176 = scmp.eq.s32.totalorder %s32, 7
      %p177 = por %p175, %p176
      %p178 = scmp.ne.s32.totalorder %s170, %s173
      %p179 = scmp.eq.s32.totalorder %s32, 0
      %p180 = por %p178, %p179
      %p181 = scmp.ne.s32.totalorder %s170, %s173
      %p182 = scmp.eq.s32.totalorder %s37, 7
      %p183 = por %p181, %p182
      %p184 = scmp.ne.s32.totalorder %s173, %s174
      %p185 = scmp.eq.s32.totalorder %s37, 0
      %p186 = por %p184, %p185
      %p187 = scmp.ne.s32.totalorder %s173, %s174
      %p188 = scmp.eq.s32.totalorder %s38, 7
      %p189 = por %p187, %p188
      %p191 = scmp.ne.s32.totalorder %s174, %s190
      %p192 = scmp.eq.s32.totalorder %s38, 0
      %p193 = por %p191, %p192
      %s194 = ssub.s32 %s39, %s51
      %p195 = scmp.eq.s32.totalorder %s194, 0
      %s197 = sadd.s32 %s196, 1
      %s198 = scalar_select %p195, %s196, %s197
      %p201 = pneg %p195
      %p202 = scmp.eq.s32.totalorder %s32, 7
      %p203 = por %p201, %p202
      %p204 = scmp.ne.s32.totalorder %s196, %s199
      %p205 = scmp.eq.s32.totalorder %s32, 0
      %p206 = por %p204, %p205
      %p207 = scmp.ne.s32.totalorder %s196, %s199
      %p208 = scmp.eq.s32.totalorder %s37, 7
      %p209 = por %p207, %p208
      %p210 = scmp.ne.s32.totalorder %s199, %s200
      %p211 = scmp.eq.s32.totalorder %s37, 0
      %p212 = por %p210, %p211
      %p213 = scmp.ne.s32.totalorder %s199, %s200
      %p214 = scmp.eq.s32.totalorder %s38, 7
      %p215 = por %p213, %p214
      %p217 = scmp.ne.s32.totalorder %s200, %s216
      %p218 = scmp.eq.s32.totalorder %s38, 0
      %p219 = por %p217, %p218
      %p220 = scmp.le.s32.totalorder 1, %s32
      %p221 = scmp.lt.s32.totalorder %s32, 9
      %p222 = pnand %p220, %p221
      %p223 = pneg %p222
      // Predicated region
      $region9: #{lightgcn_forward.1} parent=5 // pred_check
        _
      $region10: #{lightgcn_forward.1} parent=5 // pred_check_branch
        %225 = sbr.rel (%p222) target = $region12
      $region11: #{lightgcn_forward.1} parent=5 // pred_region
        %s226 = ssub.s32 %s32, 1
        // Predicated region
        $region13: #{lightgcn_forward.1} parent=11 // pred_check
          %p227 = pneg %p134
        $region14: #{lightgcn_forward.1} parent=11 // pred_check_branch
          %229 = sbr.rel (%p227) target = $region16
        $region15: #{lightgcn_forward.1} parent=11 // pred_region
          %p230 = scmp.lt.s32.totalorder %s41, 0
          %s231 = scalar_select %p230, %s41, 0
          %s232 = smul.addr %s231, 8
          %s233 = scalar_lea.vmem %s4, %s232
        $region16: #{lightgcn_forward.1} parent=11 // pred_fallthru
          _
        // Predicated region
        $region17: #{lightgcn_forward.1} parent=11 // pred_check
          %p234 = pneg %p160
        $region18: #{lightgcn_forward.1} parent=11 // pred_check_branch
          %236 = sbr.rel (%p234) target = $region20
        $region19: #{lightgcn_forward.1} parent=11 // pred_region
          %p237 = scmp.lt.s32.totalorder %s41, 0
          %s238 = scalar_select %p237, %s41, 0
          %s239 = smul.addr %s238, 8
          %s240 = scalar_lea.vmem %s5, %s239
        $region20: #{lightgcn_forward.1} parent=11 // pred_fallthru
          _
      $region12: #{lightgcn_forward.1} parent=5 // pred_fallthru
        _
      %p241 = scmp.lt.s32.totalorder %s32, 8
      // Predicated region
      $region21: #{lightgcn_forward.1} parent=5 // pred_check
        %p242 = pneg %p241
      $region22: #{lightgcn_forward.1} parent=5 // pred_check_branch
        %244 = sbr.rel (%p242) target = $region24
      $region23: #{lightgcn_forward.1} parent=5 // pred_region
        // Predicated region
        $region25: #{lightgcn_forward.1} parent=23 // pred_check
          %p245 = pneg %p70
        $region26: #{lightgcn_forward.1} parent=23 // pred_check_branch
          %247 = sbr.rel (%p245) target = $region28
        $region27: #{lightgcn_forward.1} parent=23 // pred_region
          %s248 = smul.u32 %s39, 8
          %s249 = sadd.s32 %s248, %s40
          %s250 = sld [smem:[#allocation5 + %s249]]
          %p251 = scmp.lt.s32.totalorder %s250, 63
          %s252 = scalar_select %p251, %s250, 63
          %s253 = scalar_lea.vmem %s2, %s252
          %s254 = smul.u32 %s39, 8
          %s255 = sadd.s32 %s254, %s40
          %s256 = sld [smem:[#allocation5 + %s255]]
        $region28: #{lightgcn_forward.1} parent=23 // pred_fallthru
          _
        // Predicated region
        $region29: #{lightgcn_forward.1} parent=23 // pred_check
          %p257 = pneg %p102
        $region30: #{lightgcn_forward.1} parent=23 // pred_check_branch
          %259 = sbr.rel (%p257) target = $region32
        $region31: #{lightgcn_forward.1} parent=23 // pred_region
          %s260 = sand.u32 %s92, 1
          %s261 = scalar_lea.sflag [#allocation8], %s260
          %s262 = sand.u32 %s92, 1
          %s263 = scalar_lea.vmem [#allocation7], %s262
          %s264 = smul.u32 %s39, 8
          %s265 = sadd.s32 %s264, %s40
          %s266 = sld [smem:[#allocation6 + %s265]]
          %268 = vsyncadd %s261, 0
          %s269 = scalar_lea.hbm %s3, %s266
          %s271 = sshll.u32 %s269, 4
          %s272 = int_to_ptr.hbm [resolvable:$true] %s271
          %s273 = sshll.u32 %s263, 4
          %s274 = int_to_ptr.vmem [resolvable:$true] %s273
          %276 = dma.hbm_to_vmem [thread:$0]  %s272, 16, %s274, %s261
        $region32: #{lightgcn_forward.1} parent=23 // pred_fallthru
          _
      $region24: #{lightgcn_forward.1} parent=5 // pred_fallthru
        _
      %p277 = scmp.le.s32.totalorder 1, %s32
      %p278 = scmp.lt.s32.totalorder %s32, 9
      %p279 = pnand %p277, %p278
      %p280 = pneg %p279
      // Predicated region
      $region33: #{lightgcn_forward.1} parent=5 // pred_check
        _
      $region34: #{lightgcn_forward.1} parent=5 // pred_check_branch
        %282 = sbr.rel (%p279) target = $region36
      $region35: #{lightgcn_forward.1} parent=5 // pred_region
        %s283 = ssub.s32 %s32, 1
        %s284 = sand.u32 %s95, 1
        %s285 = scalar_lea.sflag [#allocation8], %s284
        %s286 = sand.u32 %s95, 1
        %s287 = scalar_lea.vmem [#allocation7], %s286
        // Predicated region
        $region37: #{lightgcn_forward.1} parent=35 // pred_check
          %p288 = pneg %p108
        $region38: #{lightgcn_forward.1} parent=35 // pred_check_branch
          %290 = sbr.rel (%p288) target = $region40
        $region39: #{lightgcn_forward.1} parent=35 // pred_region
          %292 = dma.done %s285, 16
        $region40: #{lightgcn_forward.1} parent=35 // pred_fallthru
          _
        %s293 = smul.u32 %s41, 8
        %s294 = sadd.s32 %s293, %s42
        %s295 = sld [smem:[#allocation5 + %s294]]
        %p296 = scmp.lt.s32.totalorder %s295, 63
        %s297 = scalar_select %p296, %s295, 63
        %s298 = scalar_lea.vmem %s2, %s297
        %p299 = pneg %p76
        %p300 = pneg %p73
        %s301 = sand.u32 %s95, 1
        %s302 = scalar_lea.sflag [#allocation8], %s301
        %s303 = sand.u32 %s95, 1
        %s304 = scalar_lea.vmem [#allocation7], %s303
        %p305 = pneg %p108
        %p306 = pneg %p105
        %p307 = scmp.lt.s32.totalorder %s41, 0
        %s308 = scalar_select %p307, %s41, 0
        %s309 = smul.addr %s308, 8
        %s310 = scalar_lea.vmem %s4, %s309
        %p311 = pneg %p134
        %p312 = pneg %p131
        %p313 = scmp.lt.s32.totalorder %s41, 0
        %s314 = scalar_select %p313, %s41, 0
        %s315 = smul.addr %s314, 8
        %s316 = scalar_lea.vmem %s5, %s315
        %p317 = pneg %p160
        %p318 = pneg %p157
        %p319 = pneg %p186
        %p320 = pneg %p183
        %p321 = pneg %p212
        %p322 = pneg %p209
        %s323 = smul.u32 %s41, 8
        %s324 = sadd.s32 %s323, %s42
        %s325 = sld [smem:[#allocation5 + %s324]]
        %p326 = scmp.lt.s32.totalorder %s325, 63
        %s327 = scalar_select %p326, %s325, 63
        %s328 = scalar_lea.vmem %s2, %s327
        %s329 = smul.u32 %s41, 8
        %s330 = sadd.s32 %s329, %s42
        %s331 = sld [smem:[#allocation5 + %s330]]
        %s332 = smul.u32 %s41, 8
        %s333 = sadd.s32 %s332, %s42
        %s334 = sld [smem:[#allocation6 + %s333]]
        %p335 = scmp.lt.s32.totalorder %s41, 0
        %s336 = scalar_select %p335, %s41, 0
        %s337 = smul.addr %s336, 8
        %s338 = scalar_lea.vmem %s4, %s337
        %p339 = scmp.lt.s32.totalorder %s41, 0
        %s340 = scalar_select %p339, %s41, 0
        %s341 = smul.addr %s340, 8
        %s342 = scalar_lea.vmem %s5, %s341
        %v343 = vld [vmem:[%s328] sm:$0x1]
        %s344 = scalar_lea.vmem [#allocation2], %s42
        %345 = vst [vmem:[%s344] sm:$0x1] %v343
        %v346 = vld [vmem:[%s287] sm:$0x1]
        %s347 = scalar_lea.vmem [#allocation3], %s42
        %348 = vst [vmem:[%s347] sm:$0x1] %v346
        %p349 = scmp.eq.s32.totalorder %s42, 7
        // Predicated region
        $region41: #{lightgcn_forward.1} parent=35 // pred_check
          %p350 = pneg %p349
        $region42: #{lightgcn_forward.1} parent=35 // pred_check_branch
          %352 = sbr.rel (%p350) target = $region44
        $region43: #{lightgcn_forward.1} parent=35 // pred_region
          %v353 = vld [vmem:[#allocation2] sm:$0xff]
          %v354 = vld [vmem:[#allocation3] sm:$0xff]
          %v355 = vld [vmem:[%s338] sm:$0xff]
          %vm356 = vcmp.ge.f32.partialorder %v355, 0.2
          %v357 = vmul.f32 %v353, 1.25
          %v358 = vsel %vm356, %v357, 0.0
          %v359 = vld [vmem:[%s342] sm:$0xff]
          %vm360 = vcmp.ge.f32.partialorder %v359, 0.2
          %v361 = vmul.f32 %v354, 1.25
          %v362 = vsel %vm360, %v361, 0.0
          %363 = vst [vmem:[#allocation10] sm:$0xff] %v358
          %364 = vst [vmem:[#allocation11] sm:$0xff] %v362
        $region44: #{lightgcn_forward.1} parent=35 // pred_fallthru
          _
        // Predicated region
        $region45: #{lightgcn_forward.1} parent=35 // pred_check
          %p365 = pneg %p183
        $region46: #{lightgcn_forward.1} parent=35 // pred_check_branch
          %367 = sbr.rel (%p365) target = $region48
        $region47: #{lightgcn_forward.1} parent=35 // pred_region
          %369 = vsyncadd [#allocation9], 0
          %s370 = smul.addr %s41, 8
          %s371 = scalar_lea.hbm %s6, %s370
          %s373 = sshll.u32 [#allocation10], 4
          %s374 = int_to_ptr.vmem [resolvable:$true] %s373
          %s375 = sshll.u32 %s371, 4
          %s376 = int_to_ptr.hbm [resolvable:$true] %s375
          %378 = dma.vmem_to_hbm [thread:$0]  %s374, 128, %s376, [#allocation9]
        $region48: #{lightgcn_forward.1} parent=35 // pred_fallthru
          _
        // Predicated region
        $region49: #{lightgcn_forward.1} parent=35 // pred_check
          %p379 = pneg %p209
        $region50: #{lightgcn_forward.1} parent=35 // pred_check_branch
          %381 = sbr.rel (%p379) target = $region52
        $region51: #{lightgcn_forward.1} parent=35 // pred_region
          %383 = vsyncadd [#allocation12], 0
          %s384 = smul.addr %s41, 8
          %s385 = scalar_lea.hbm %s7, %s384
          %s387 = sshll.u32 [#allocation11], 4
          %s388 = int_to_ptr.vmem [resolvable:$true] %s387
          %s389 = sshll.u32 %s385, 4
          %s390 = int_to_ptr.hbm [resolvable:$true] %s389
          %392 = dma.vmem_to_hbm [thread:$0]  %s388, 128, %s390, [#allocation12]
        $region52: #{lightgcn_forward.1} parent=35 // pred_fallthru
          _
        // Predicated region
        $region53: #{lightgcn_forward.1} parent=35 // pred_check
          %p393 = pneg %p183
        $region54: #{lightgcn_forward.1} parent=35 // pred_check_branch
          %395 = sbr.rel (%p393) target = $region56
        $region55: #{lightgcn_forward.1} parent=35 // pred_region
          %397 = dma.done [#allocation9], 128
        $region56: #{lightgcn_forward.1} parent=35 // pred_fallthru
          _
        // Predicated region
        $region57: #{lightgcn_forward.1} parent=35 // pred_check
          %p398 = pneg %p209
        $region58: #{lightgcn_forward.1} parent=35 // pred_check_branch
          %400 = sbr.rel (%p398) target = $region60
        $region59: #{lightgcn_forward.1} parent=35 // pred_region
          %402 = dma.done [#allocation12], 128
        $region60: #{lightgcn_forward.1} parent=35 // pred_fallthru
          _
      $region36: #{lightgcn_forward.1} parent=5 // pred_fallthru
        _
      %p403 = scmp.le.s32.totalorder 2, %s32
      // Predicated region
      $region61: #{lightgcn_forward.1} parent=5 // pred_check
        %p404 = pneg %p403
      $region62: #{lightgcn_forward.1} parent=5 // pred_check_branch
        %406 = sbr.rel (%p404) target = $region64
      $region63: #{lightgcn_forward.1} parent=5 // pred_region
        %s407 = ssub.s32 %s32, 2
      $region64: #{lightgcn_forward.1} parent=5 // pred_fallthru
        _
    $region6: #{lightgcn_forward.1} parent=1 // loop_footer
      %s36 = sadd.s32 1, %s32
    $region7: #{lightgcn_forward.1} parent=1 // loop_footer_branch
      %31 = sbr.rel target = $region3
    $region8: #{lightgcn_forward.1} parent=1 // loop_exit
      _
    %408 = vsyncpa [#allocation8], 1
    %s409 = scalar_lea.sflag [#allocation8], 1
    %410 = vsyncpa %s409, 1
    %411 = vsyncpa [#allocation9], 1
    %s412 = scalar_lea.sflag [#allocation9], 1
    %413 = vsyncpa %s412, 1
    %414 = vsyncpa [#allocation12], 1

</llo_original>
